<compile_context>
chip_gen: v5e
topology: v5e:2x2
jax: 0.10.0
libtpu: 0.0.40
codegen_flags: <defaults>
</compile_context>

<pallas_src>
import functools

import jax
import jax.numpy as jnp
import numpy as np
from jax import lax
from jax.experimental import pallas as pl
from jax.experimental.pallas import tpu as pltpu

NEG_SLOPE = 0.01  # nn.LeakyReLU() default negative_slope


def _round_up(v, m):
    return ((v + m - 1) // m) * m


# ---------------------------------------------------------------------------
# Kernel 1: polyphase ConvTranspose2d(3x3, s=2, p=1, op=1) + bias + LeakyReLU.
#   x_ref   : (C_in, FP) bf16 -- zero-padded input flattened spatially with row pitch
#             `row_pitch` = W+1 (one pad column per row, two pad rows at the bottom).
#   wXY_ref : (m_blk, C_in) bf16 -- polyphase weight for input offset (dy,dx)=(X,Y);
#             rows ordered (py, px, o) phase-major.
#   o_ref   : (m_blk, H*row_pitch) bf16 -- phase-major rows, flat (i, j) columns
#             (column j == W of each row is junk; dropped by the caller).
# No K grid, no VMEM scratch: the 4 shifted matmuls accumulate in vregs.
# ---------------------------------------------------------------------------
def _upconv_kernel(w00_ref, w01_ref, w10_ref, w11_ref, x_ref, b_ref, o_ref, *,
                   row_pitch):
    nf = o_ref.shape[-1]
    x = x_ref[...]                                           # (C_in, FP) bf16
    acc = jnp.dot(w00_ref[...], x[:, 0:nf],
                  preferred_element_type=jnp.float32)
    acc += jnp.dot(w01_ref[...], x[:, 1:1 + nf],
                   preferred_element_type=jnp.float32)
    acc += jnp.dot(w10_ref[...], x[:, row_pitch:row_pitch + nf],
                   preferred_element_type=jnp.float32)
    acc += jnp.dot(w11_ref[...], x[:, row_pitch + 1:row_pitch + 1 + nf],
                   preferred_element_type=jnp.float32)
    z = acc + b_ref[...]                                     # (m_blk, 1) broadcasts
    o_ref[...] = jnp.where(z >= 0, z, NEG_SLOPE * z).astype(o_ref.dtype)


def _upconv_pallas(xflat, w00, w01, w10, w11, bias1, *, row_pitch, nf, m_blk):
    m_total, c_in = w00.shape
    fp = xflat.shape[1]
    grid = (m_total // m_blk,)                               # 2 phase-row blocks
    kernel = functools.partial(_upconv_kernel, row_pitch=row_pitch)
    return pl.pallas_call(
        kernel,
        out_shape=jax.ShapeDtypeStruct((m_total, nf), jnp.bfloat16),
        grid=grid,
        in_specs=[
            pl.BlockSpec((m_blk, c_in), lambda i: (i, 0)),
            pl.BlockSpec((m_blk, c_in), lambda i: (i, 0)),
            pl.BlockSpec((m_blk, c_in), lambda i: (i, 0)),
            pl.BlockSpec((m_blk, c_in), lambda i: (i, 0)),
            pl.BlockSpec((c_in, fp), lambda i: (0, 0)),      # resident across blocks
            pl.BlockSpec((m_blk, 1), lambda i: (i, 0)),
        ],
        out_specs=pl.BlockSpec((m_blk, nf), lambda i: (i, 0)),
        compiler_params=pltpu.CompilerParams(
            dimension_semantics=("parallel",)),
    )(w00, w01, w10, w11, xflat, bias1)


# ---------------------------------------------------------------------------
# Kernel 2: Conv1d(in_size, out_size, k=3, pad=1) + bias + LeakyReLU over
# cat(up, bridge) WITHOUT materializing the concat or the 3-tap im2col.
# One conv1d batch element (n = up channel) per grid step.
#   up_ref : (1, 2H, L+2) bf16 (zero-padded along L)
#   br_ref : (1, H_b, L+2) bf16
#   wu_ref : (3, O_pad, 2H) bf16   wb_ref : (3, O_pad, H_b) bf16
#   b_ref  : (O_pad, 1) f32        o_ref  : (1, O, L) f32
# ---------------------------------------------------------------------------
def _conv1d_kernel(up_ref, br_ref, wu_ref, wb_ref, b_ref, o_ref):
    l = o_ref.shape[-1]
    o = o_ref.shape[-2]
    u = up_ref[0]                                            # (2H, L+2)
    v = br_ref[0]                                            # (H_b, L+2)
    acc = jnp.dot(wu_ref[0], u[:, 0:l], preferred_element_type=jnp.float32)
    acc += jnp.dot(wb_ref[0], v[:, 0:l], preferred_element_type=jnp.float32)
    for t in (1, 2):                                         # static 3-tap loop
        acc += jnp.dot(wu_ref[t], u[:, t:t + l],
                       preferred_element_type=jnp.float32)
        acc += jnp.dot(wb_ref[t], v[:, t:t + l],
                       preferred_element_type=jnp.float32)
    z = acc[:o, :] + b_ref[:o, :]
    o_ref[0] = jnp.where(z >= 0, z, NEG_SLOPE * z)


def _conv1d_pallas(up_pad, br_pad, wu, wb, bias2, *, out_channels):
    n, c_up, lp = up_pad.shape
    _, c_br, _ = br_pad.shape
    l = lp - 2
    o_pad = wu.shape[1]
    return pl.pallas_call(
        _conv1d_kernel,
        out_shape=jax.ShapeDtypeStruct((n, out_channels, l), jnp.float32),
        grid=(n,),
        in_specs=[
            pl.BlockSpec((1, c_up, lp), lambda i: (i, 0, 0)),
            pl.BlockSpec((1, c_br, lp), lambda i: (i, 0, 0)),
            pl.BlockSpec((3, o_pad, c_up), lambda i: (0, 0, 0)),   # weights resident
            pl.BlockSpec((3, o_pad, c_br), lambda i: (0, 0, 0)),
            pl.BlockSpec((o_pad, 1), lambda i: (0, 0)),
        ],
        out_specs=pl.BlockSpec((1, out_channels, l), lambda i: (i, 0, 0)),
        compiler_params=pltpu.CompilerParams(
            dimension_semantics=("parallel",)),
    )(up_pad, br_pad, wu, wb, bias2)


# ---------------------------------------------------------------------------
# Weight preparation -- done ONCE at weight-load time, outside the jitted forward
# (hoists the polyphase scatter, bf16 casts, bias tiling and 16-row padding).
# ---------------------------------------------------------------------------
def prepare_params(w_up, b_up, w_c1, b_c1, h):
    c_in, c_out = w_up.shape[0], w_up.shape[1]
    wt = jnp.asarray(w_up, jnp.float32).transpose(1, 0, 2, 3)   # (C_out, C_in, kh, kw)

    # Polyphase weight: out[o, 2i+py, 2j+px] depends only on the 2x2 patch xpad[:, i+dy, j+dx].
    wp = jnp.zeros((2, 2, c_out, 2, 2, c_in), jnp.float32)      # [py, px, o, dy, dx, c]
    wp = wp.at[0, 0, :, 0, 0, :].set(wt[:, :, 1, 1])
    wp = wp.at[0, 1, :, 0, 0, :].set(wt[:, :, 1, 2])
    wp = wp.at[0, 1, :, 0, 1, :].set(wt[:, :, 1, 0])
    wp = wp.at[1, 0, :, 0, 0, :].set(wt[:, :, 2, 1])
    wp = wp.at[1, 0, :, 1, 0, :].set(wt[:, :, 0, 1])
    wp = wp.at[1, 1, :, 0, 0, :].set(wt[:, :, 2, 2])
    wp = wp.at[1, 1, :, 0, 1, :].set(wt[:, :, 2, 0])
    wp = wp.at[1, 1, :, 1, 0, :].set(wt[:, :, 0, 2])
    wp = wp.at[1, 1, :, 1, 1, :].set(wt[:, :, 0, 0])
    wp = wp.reshape(4 * c_out, 2, 2, c_in)                      # rows (py, px, o)
    w00 = wp[:, 0, 0, :].astype(jnp.bfloat16)
    w01 = wp[:, 0, 1, :].astype(jnp.bfloat16)
    w10 = wp[:, 1, 0, :].astype(jnp.bfloat16)
    w11 = wp[:, 1, 1, :].astype(jnp.bfloat16)
    bias1 = jnp.tile(jnp.asarray(b_up, jnp.float32), 4)[:, None]  # (4*C_out, 1)

    # Conv1d weight split into the `up` channel range [0, 2h) and the bridge range,
    # O padded to a multiple of 16 (bf16 sublane packing).
    out_size, in_size, _ = w_c1.shape
    o_pad = _round_up(max(out_size, 16), 16)
    wc = jnp.zeros((3, o_pad, in_size), jnp.float32)
    wc = wc.at[:, :out_size, :].set(
        jnp.transpose(jnp.asarray(w_c1, jnp.float32), (2, 0, 1)))
    wu = wc[:, :, :2 * h].astype(jnp.bfloat16)
    wb = wc[:, :, 2 * h:].astype(jnp.bfloat16)
    bias2 = jnp.zeros((o_pad, 1), jnp.float32).at[:out_size, 0].set(
        jnp.asarray(b_c1, jnp.float32))
    return dict(w00=w00, w01=w01, w10=w10, w11=w11, bias1=bias1,
                wu=wu, wb=wb, bias2=bias2)


# ---------------------------------------------------------------------------
# Forward pass of UNetUpBlock (up_mode='upconv').
# ---------------------------------------------------------------------------
@jax.jit
def unet_up_block_forward(x, bridge, params):
    c_in, h, w = x.shape
    c_out = params["bias1"].shape[0] // 4        # == out_size for this module
    out_size = c_out
    row_pitch = w + 1
    nf = h * row_pitch
    assert params["wu"].shape[2] == 2 * h
    assert params["wb"].shape[2] == bridge.shape[1]
    assert bridge.shape[0] == c_out

    # ---- self.up : ConvTranspose2d + LeakyReLU (polyphase, shifts done in-kernel) ----
    xflat = jnp.pad(x, ((0, 0), (0, 2), (0, 1))).astype(jnp.bfloat16)
    xflat = xflat.reshape(c_in, (h + 2) * row_pitch)
    m_blk = 2 * c_out                             # 2 grid steps -> both TCs on v7x
    up_poly = _upconv_pallas(
        xflat, params["w00"], params["w01"], params["w10"], params["w11"],
        params["bias1"], row_pitch=row_pitch, nf=nf, m_blk=m_blk)

    # ---- single fused layout pass: phase interleave to (C_out, 2H, 2W) + L-halo pad ---
    # TODO(synk): fold this pass into kernel 2 via strided loads on the phase buffer.
    u = up_poly.reshape(2, 2, c_out, h, row_pitch)[:, :, :, :, :w]
    u = u.transpose(2, 3, 0, 4, 1).reshape(c_out, 2 * h, 2 * w)
    up_pad = jnp.pad(u, ((0, 0), (0, 0), (1, 1)))

    br_pad = jnp.pad(bridge.astype(jnp.bfloat16), ((0, 0), (0, 0), (1, 1)))

    # ---- torch.cat + self.conv_block (Conv1d k=3 p=1 + LeakyReLU), fully in-kernel ----
    out = _conv1d_pallas(up_pad, br_pad, params["wu"], params["wb"],
                         params["bias2"], out_channels=out_size)
    return out                                    # (N=out_size, out_size, 2W)


# ---------------------------------------------------------------------------
# Independent pure-JAX reference (lax convolutions, f32) for verification.
# ---------------------------------------------------------------------------
def reference(x, bridge, w_up, b_up, w_c1, b_c1):
    w_flip = jnp.flip(w_up, axis=(2, 3)).transpose(1, 0, 2, 3)
    up = lax.conv_general_dilated(
        x[None], w_flip, window_strides=(1, 1),
        padding=((1, 2), (1, 2)), lhs_dilation=(2, 2),
        dimension_numbers=("NCHW", "OIHW", "NCHW"),
        precision=lax.Precision.HIGHEST,
    )[0] + b_up[:, None, None]
    up = jnp.where(up >= 0, up, NEG_SLOPE * up)
    cat = jnp.concatenate([up, bridge], axis=1)
    z = lax.conv_general_dilated(
        cat, w_c1, window_strides=(1,), padding=((1, 1),),
        dimension_numbers=("NCH", "OIH", "NCH"),
        precision=lax.Precision.HIGHEST,
    ) + b_c1[None, :, None]
    return jnp.where(z >= 0, z, NEG_SLOPE * z)


if __name__ == "__main__":
    in_size, out_size = 16, 8
    H, W = 4, 16                       # up -> (out_size, 2H, 2W) = (8, 8, 32)
    Hb = in_size - 2 * H               # so cat dim-1 == in_size (Conv1d in_channels)

    key = jax.random.PRNGKey(0)
    ks = jax.random.split(key, 6)
    x = jax.random.normal(ks[0], (in_size, H, W), jnp.float32)
    bridge = jax.random.normal(ks[1], (out_size, Hb, 2 * W), jnp.float32)
    # ConvTranspose2d weight: (in, out, 3, 3); Conv1d weight: (out, in, 3)
    w_up = 0.1 * jax.random.normal(ks[2], (in_size, out_size, 3, 3), jnp.float32)
    b_up = 0.1 * jax.random.normal(ks[3], (out_size,), jnp.float32)
    w_c1 = 0.1 * jax.random.normal(ks[4], (out_size, in_size, 3), jnp.float32)
    b_c1 = 0.1 * jax.random.normal(ks[5], (out_size,), jnp.float32)

    params = prepare_params(w_up, b_up, w_c1, b_c1, H)   # once, outside jit

    out = unet_up_block_forward(x, bridge, params)
    out = jax.block_until_ready(out)

    ref = reference(x, bridge, w_up, b_up, w_c1, b_c1)
    assert out.shape == (out_size, out_size, 2 * W), out.shape
    # Precision contract: bf16 MXU inputs / bf16 intermediate `up` with f32 accumulation.
    np.testing.assert_allclose(np.asarray(out), np.asarray(ref), rtol=2e-2, atol=2e-2)
    print("KERNEL_OK")
</pallas_src>

<mosaic_0001>
module attributes {stable_mosaic.version = 11 : i64} {
  func.func @_conv1d_kernel(%arg0: i32, %arg1: memref<1x8x34xbf16, #tpu.memory_space<vmem>>, %arg2: memref<1x8x34xbf16, #tpu.memory_space<vmem>>, %arg3: memref<3x16x8xbf16, #tpu.memory_space<vmem>>, %arg4: memref<3x16x8xbf16, #tpu.memory_space<vmem>>, %arg5: memref<16x1xf32, #tpu.memory_space<vmem>>, %arg6: memref<1x8x32xf32, #tpu.memory_space<vmem>>) attributes {dimension_semantics = [#tpu.dimension_semantics<parallel>], iteration_bounds = array<i64: 8>, scalar_prefetch = 0 : i64, scratch_operands = 0 : i64, tpu.core_type = #tpu.core_type<tc>, window_params = [{transform_indices = @transform_0, window_bounds = array<i64: 1, 8, 34>}, {transform_indices = @transform_1, window_bounds = array<i64: 1, 8, 34>}, {pipeline_mode = #tpu.pipeline_mode<synchronous>, transform_indices = @transform_2, window_bounds = array<i64: 3, 16, 8>}, {pipeline_mode = #tpu.pipeline_mode<synchronous>, transform_indices = @transform_3, window_bounds = array<i64: 3, 16, 8>}, {pipeline_mode = #tpu.pipeline_mode<synchronous>, transform_indices = @transform_4, window_bounds = array<i64: 16, 1>}, {transform_indices = @transform_5, window_bounds = array<i64: 1, 8, 32>}]} {
    %c0 = arith.constant 0 : index
    %c0_0 = arith.constant 0 : index
    %c0_1 = arith.constant 0 : index
    %0 = vector.load %arg1[%c0, %c0_0, %c0_1] : memref<1x8x34xbf16, #tpu.memory_space<vmem>>, vector<1x8x34xbf16>
    %1 = vector.shape_cast %0 : vector<1x8x34xbf16> to vector<8x34xbf16>
    %c0_2 = arith.constant 0 : index
    %c0_3 = arith.constant 0 : index
    %c0_4 = arith.constant 0 : index
    %2 = vector.load %arg2[%c0_2, %c0_3, %c0_4] : memref<1x8x34xbf16, #tpu.memory_space<vmem>>, vector<1x8x34xbf16>
    %3 = vector.shape_cast %2 : vector<1x8x34xbf16> to vector<8x34xbf16>
    %c0_5 = arith.constant 0 : index
    %c0_6 = arith.constant 0 : index
    %c0_7 = arith.constant 0 : index
    %4 = vector.load %arg3[%c0_5, %c0_6, %c0_7] : memref<3x16x8xbf16, #tpu.memory_space<vmem>>, vector<1x16x8xbf16>
    %5 = vector.shape_cast %4 : vector<1x16x8xbf16> to vector<16x8xbf16>
    %6 = vector.extract_strided_slice %1 {offsets = [0, 0], sizes = [8, 32], strides = [1, 1]} : vector<8x34xbf16> to vector<8x32xbf16>
    %cst = arith.constant dense<0.000000e+00> : vector<16x32xf32>
    %7 = tpu.matmul %5, %6, %cst {dimension_numbers = #tpu.dot_dimension_numbers<[1], [0], [0], [1], [0, 0, 1, 1], [], []>} : vector<16x8xbf16>, vector<8x32xbf16>, vector<16x32xf32> -> vector<16x32xf32>
    %c0_8 = arith.constant 0 : index
    %c0_9 = arith.constant 0 : index
    %c0_10 = arith.constant 0 : index
    %8 = vector.load %arg4[%c0_8, %c0_9, %c0_10] : memref<3x16x8xbf16, #tpu.memory_space<vmem>>, vector<1x16x8xbf16>
    %9 = vector.shape_cast %8 : vector<1x16x8xbf16> to vector<16x8xbf16>
    %10 = vector.extract_strided_slice %3 {offsets = [0, 0], sizes = [8, 32], strides = [1, 1]} : vector<8x34xbf16> to vector<8x32xbf16>
    %cst_11 = arith.constant dense<0.000000e+00> : vector<16x32xf32>
    %11 = tpu.matmul %9, %10, %cst_11 {dimension_numbers = #tpu.dot_dimension_numbers<[1], [0], [0], [1], [0, 0, 1, 1], [], []>} : vector<16x8xbf16>, vector<8x32xbf16>, vector<16x32xf32> -> vector<16x32xf32>
    %12 = arith.addf %7, %11 : vector<16x32xf32>
    %c1 = arith.constant 1 : index
    %c0_12 = arith.constant 0 : index
    %c0_13 = arith.constant 0 : index
    %13 = vector.load %arg3[%c1, %c0_12, %c0_13] : memref<3x16x8xbf16, #tpu.memory_space<vmem>>, vector<1x16x8xbf16>
    %14 = vector.shape_cast %13 : vector<1x16x8xbf16> to vector<16x8xbf16>
    %15 = vector.extract_strided_slice %1 {offsets = [0, 1], sizes = [8, 32], strides = [1, 1]} : vector<8x34xbf16> to vector<8x32xbf16>
    %cst_14 = arith.constant dense<0.000000e+00> : vector<16x32xf32>
    %16 = tpu.matmul %14, %15, %cst_14 {dimension_numbers = #tpu.dot_dimension_numbers<[1], [0], [0], [1], [0, 0, 1, 1], [], []>} : vector<16x8xbf16>, vector<8x32xbf16>, vector<16x32xf32> -> vector<16x32xf32>
    %17 = arith.addf %12, %16 : vector<16x32xf32>
    %c1_15 = arith.constant 1 : index
    %c0_16 = arith.constant 0 : index
    %c0_17 = arith.constant 0 : index
    %18 = vector.load %arg4[%c1_15, %c0_16, %c0_17] : memref<3x16x8xbf16, #tpu.memory_space<vmem>>, vector<1x16x8xbf16>
    %19 = vector.shape_cast %18 : vector<1x16x8xbf16> to vector<16x8xbf16>
    %20 = vector.extract_strided_slice %3 {offsets = [0, 1], sizes = [8, 32], strides = [1, 1]} : vector<8x34xbf16> to vector<8x32xbf16>
    %cst_18 = arith.constant dense<0.000000e+00> : vector<16x32xf32>
    %21 = tpu.matmul %19, %20, %cst_18 {dimension_numbers = #tpu.dot_dimension_numbers<[1], [0], [0], [1], [0, 0, 1, 1], [], []>} : vector<16x8xbf16>, vector<8x32xbf16>, vector<16x32xf32> -> vector<16x32xf32>
    %22 = arith.addf %17, %21 : vector<16x32xf32>
    %c2 = arith.constant 2 : index
    %c0_19 = arith.constant 0 : index
    %c0_20 = arith.constant 0 : index
    %23 = vector.load %arg3[%c2, %c0_19, %c0_20] : memref<3x16x8xbf16, #tpu.memory_space<vmem>>, vector<1x16x8xbf16>
    %24 = vector.shape_cast %23 : vector<1x16x8xbf16> to vector<16x8xbf16>
    %25 = vector.extract_strided_slice %1 {offsets = [0, 2], sizes = [8, 32], strides = [1, 1]} : vector<8x34xbf16> to vector<8x32xbf16>
    %cst_21 = arith.constant dense<0.000000e+00> : vector<16x32xf32>
    %26 = tpu.matmul %24, %25, %cst_21 {dimension_numbers = #tpu.dot_dimension_numbers<[1], [0], [0], [1], [0, 0, 1, 1], [], []>} : vector<16x8xbf16>, vector<8x32xbf16>, vector<16x32xf32> -> vector<16x32xf32>
    %27 = arith.addf %22, %26 : vector<16x32xf32>
    %c2_22 = arith.constant 2 : index
    %c0_23 = arith.constant 0 : index
    %c0_24 = arith.constant 0 : index
    %28 = vector.load %arg4[%c2_22, %c0_23, %c0_24] : memref<3x16x8xbf16, #tpu.memory_space<vmem>>, vector<1x16x8xbf16>
    %29 = vector.shape_cast %28 : vector<1x16x8xbf16> to vector<16x8xbf16>
    %30 = vector.extract_strided_slice %3 {offsets = [0, 2], sizes = [8, 32], strides = [1, 1]} : vector<8x34xbf16> to vector<8x32xbf16>
    %cst_25 = arith.constant dense<0.000000e+00> : vector<16x32xf32>
    %31 = tpu.matmul %29, %30, %cst_25 {dimension_numbers = #tpu.dot_dimension_numbers<[1], [0], [0], [1], [0, 0, 1, 1], [], []>} : vector<16x8xbf16>, vector<8x32xbf16>, vector<16x32xf32> -> vector<16x32xf32>
    %32 = arith.addf %27, %31 : vector<16x32xf32>
    %33 = vector.extract_strided_slice %32 {offsets = [0, 0], sizes = [8, 32], strides = [1, 1]} : vector<16x32xf32> to vector<8x32xf32>
    %c0_26 = arith.constant 0 : index
    %c0_27 = arith.constant 0 : index
    %34 = vector.load %arg5[%c0_26, %c0_27] : memref<16x1xf32, #tpu.memory_space<vmem>>, vector<8x1xf32>
    %35 = vector.broadcast %34 : vector<8x1xf32> to vector<8x32xf32>
    %36 = arith.addf %33, %35 : vector<8x32xf32>
    %cst_28 = arith.constant 0.000000e+00 : f32
    %37 = vector.broadcast %cst_28 : f32 to vector<8x32xf32>
    %38 = arith.cmpf oge, %36, %37 : vector<8x32xf32>
    %cst_29 = arith.constant 0.00999999977 : f32
    %39 = vector.broadcast %cst_29 : f32 to vector<8x32xf32>
    %40 = arith.mulf %39, %36 : vector<8x32xf32>
    %41 = arith.select %38, %36, %40 : vector<8x32xi1>, vector<8x32xf32>
    %c0_30 = arith.constant 0 : index
    %c0_31 = arith.constant 0 : index
    %c0_32 = arith.constant 0 : index
    %42 = vector.load %arg6[%c0_30, %c0_31, %c0_32] : memref<1x8x32xf32, #tpu.memory_space<vmem>>, vector<1x8x32xf32>
    %43 = vector.shape_cast %42 : vector<1x8x32xf32> to vector<8x32xf32>
    %44 = vector.shape_cast %41 : vector<8x32xf32> to vector<1x8x32xf32>
    tpu.vector_store %arg6[%c0_30, %c0_31, %c0_32], %44 {strides = array<i32>} : memref<1x8x32xf32, #tpu.memory_space<vmem>>, vector<1x8x32xf32>,
    return
  }
  func.func @transform_0(%arg0: i32) -> (i32, i32, i32) {
    %c0_i32 = arith.constant 0 : i32
    %c0_i32_0 = arith.constant 0 : i32
    %c0_i32_1 = arith.constant 0 : i32
    return %arg0, %c0_i32, %c0_i32_0 : i32, i32, i32
  }
  func.func @transform_1(%arg0: i32) -> (i32, i32, i32) {
    %c0_i32 = arith.constant 0 : i32
    %c0_i32_0 = arith.constant 0 : i32
    %c0_i32_1 = arith.constant 0 : i32
    return %arg0, %c0_i32, %c0_i32_0 : i32, i32, i32
  }
  func.func @transform_2(%arg0: i32) -> (i32, i32, i32) {
    %c0_i32 = arith.constant 0 : i32
    %c0_i32_0 = arith.constant 0 : i32
    %c0_i32_1 = arith.constant 0 : i32
    %c0_i32_2 = arith.constant 0 : i32
    return %c0_i32, %c0_i32_0, %c0_i32_1 : i32, i32, i32
  }
  func.func @transform_3(%arg0: i32) -> (i32, i32, i32) {
    %c0_i32 = arith.constant 0 : i32
    %c0_i32_0 = arith.constant 0 : i32
    %c0_i32_1 = arith.constant 0 : i32
    %c0_i32_2 = arith.constant 0 : i32
    return %c0_i32, %c0_i32_0, %c0_i32_1 : i32, i32, i32
  }
  func.func @transform_4(%arg0: i32) -> (i32, i32) {
    %c0_i32 = arith.constant 0 : i32
    %c0_i32_0 = arith.constant 0 : i32
    %c0_i32_1 = arith.constant 0 : i32
    return %c0_i32, %c0_i32_0 : i32, i32
  }
  func.func @transform_5(%arg0: i32) -> (i32, i32, i32) {
    %c0_i32 = arith.constant 0 : i32
    %c0_i32_0 = arith.constant 0 : i32
    %c0_i32_1 = arith.constant 0 : i32
    return %arg0, %c0_i32, %c0_i32_0 : i32, i32, i32
  }
}

module attributes {stable_mosaic.version = 11 : i64} {
  func.func @_upconv_kernel(%arg0: i32, %arg1: memref<16x16xbf16, #tpu.memory_space<vmem>>, %arg2: memref<16x16xbf16, #tpu.memory_space<vmem>>, %arg3: memref<16x16xbf16, #tpu.memory_space<vmem>>, %arg4: memref<16x16xbf16, #tpu.memory_space<vmem>>, %arg5: memref<16x102xbf16, #tpu.memory_space<vmem>>, %arg6: memref<16x1xf32, #tpu.memory_space<vmem>>, %arg7: memref<16x68xbf16, #tpu.memory_space<vmem>>) attributes {dimension_semantics = [#tpu.dimension_semantics<parallel>], iteration_bounds = array<i64: 2>, scalar_prefetch = 0 : i64, scratch_operands = 0 : i64, tpu.core_type = #tpu.core_type<tc>, window_params = [{transform_indices = @transform_0, window_bounds = array<i64: 16, 16>}, {transform_indices = @transform_1, window_bounds = array<i64: 16, 16>}, {transform_indices = @transform_2, window_bounds = array<i64: 16, 16>}, {transform_indices = @transform_3, window_bounds = array<i64: 16, 16>}, {pipeline_mode = #tpu.pipeline_mode<synchronous>, transform_indices = @transform_4, window_bounds = array<i64: 16, 102>}, {transform_indices = @transform_5, window_bounds = array<i64: 16, 1>}, {transform_indices = @transform_6, window_bounds = array<i64: 16, 68>}]} {
    %c0 = arith.constant 0 : index
    %c0_0 = arith.constant 0 : index
    %0 = vector.load %arg5[%c0, %c0_0] : memref<16x102xbf16, #tpu.memory_space<vmem>>, vector<16x102xbf16>
    %c0_1 = arith.constant 0 : index
    %c0_2 = arith.constant 0 : index
    %1 = vector.load %arg1[%c0_1, %c0_2] : memref<16x16xbf16, #tpu.memory_space<vmem>>, vector<16x16xbf16>
    %2 = vector.extract_strided_slice %0 {offsets = [0, 0], sizes = [16, 68], strides = [1, 1]} : vector<16x102xbf16> to vector<16x68xbf16>
    %cst = arith.constant dense<0.000000e+00> : vector<16x68xf32>
    %3 = tpu.matmul %1, %2, %cst {dimension_numbers = #tpu.dot_dimension_numbers<[1], [0], [0], [1], [0, 0, 1, 1], [], []>} : vector<16x16xbf16>, vector<16x68xbf16>, vector<16x68xf32> -> vector<16x68xf32>
    %c0_3 = arith.constant 0 : index
    %c0_4 = arith.constant 0 : index
    %4 = vector.load %arg2[%c0_3, %c0_4] : memref<16x16xbf16, #tpu.memory_space<vmem>>, vector<16x16xbf16>
    %5 = vector.extract_strided_slice %0 {offsets = [0, 1], sizes = [16, 68], strides = [1, 1]} : vector<16x102xbf16> to vector<16x68xbf16>
    %cst_5 = arith.constant dense<0.000000e+00> : vector<16x68xf32>
    %6 = tpu.matmul %4, %5, %cst_5 {dimension_numbers = #tpu.dot_dimension_numbers<[1], [0], [0], [1], [0, 0, 1, 1], [], []>} : vector<16x16xbf16>, vector<16x68xbf16>, vector<16x68xf32> -> vector<16x68xf32>
    %7 = arith.addf %3, %6 : vector<16x68xf32>
    %c0_6 = arith.constant 0 : index
    %c0_7 = arith.constant 0 : index
    %8 = vector.load %arg3[%c0_6, %c0_7] : memref<16x16xbf16, #tpu.memory_space<vmem>>, vector<16x16xbf16>
    %9 = vector.extract_strided_slice %0 {offsets = [0, 17], sizes = [16, 68], strides = [1, 1]} : vector<16x102xbf16> to vector<16x68xbf16>
    %cst_8 = arith.constant dense<0.000000e+00> : vector<16x68xf32>
    %10 = tpu.matmul %8, %9, %cst_8 {dimension_numbers = #tpu.dot_dimension_numbers<[1], [0], [0], [1], [0, 0, 1, 1], [], []>} : vector<16x16xbf16>, vector<16x68xbf16>, vector<16x68xf32> -> vector<16x68xf32>
    %11 = arith.addf %7, %10 : vector<16x68xf32>
    %c0_9 = arith.constant 0 : index
    %c0_10 = arith.constant 0 : index
    %12 = vector.load %arg4[%c0_9, %c0_10] : memref<16x16xbf16, #tpu.memory_space<vmem>>, vector<16x16xbf16>
    %13 = vector.extract_strided_slice %0 {offsets = [0, 18], sizes = [16, 68], strides = [1, 1]} : vector<16x102xbf16> to vector<16x68xbf16>
    %cst_11 = arith.constant dense<0.000000e+00> : vector<16x68xf32>
    %14 = tpu.matmul %12, %13, %cst_11 {dimension_numbers = #tpu.dot_dimension_numbers<[1], [0], [0], [1], [0, 0, 1, 1], [], []>} : vector<16x16xbf16>, vector<16x68xbf16>, vector<16x68xf32> -> vector<16x68xf32>
    %15 = arith.addf %11, %14 : vector<16x68xf32>
    %c0_12 = arith.constant 0 : index
    %c0_13 = arith.constant 0 : index
    %16 = vector.load %arg6[%c0_12, %c0_13] : memref<16x1xf32, #tpu.memory_space<vmem>>, vector<16x1xf32>
    %17 = vector.broadcast %16 : vector<16x1xf32> to vector<16x68xf32>
    %18 = arith.addf %15, %17 : vector<16x68xf32>
    %cst_14 = arith.constant 0.000000e+00 : f32
    %19 = vector.broadcast %cst_14 : f32 to vector<16x68xf32>
    %20 = arith.cmpf oge, %18, %19 : vector<16x68xf32>
    %cst_15 = arith.constant 0.00999999977 : f32
    %21 = vector.broadcast %cst_15 : f32 to vector<16x68xf32>
    %22 = arith.mulf %21, %18 : vector<16x68xf32>
    %23 = arith.select %20, %18, %22 : vector<16x68xi1>, vector<16x68xf32>
    %24 = arith.truncf %23 : vector<16x68xf32> to vector<16x68xbf16>
    %c0_16 = arith.constant 0 : index
    %c0_17 = arith.constant 0 : index
    %25 = vector.load %arg7[%c0_16, %c0_17] : memref<16x68xbf16, #tpu.memory_space<vmem>>, vector<16x68xbf16>
    tpu.vector_store %arg7[%c0_16, %c0_17], %24 {strides = array<i32>} : memref<16x68xbf16, #tpu.memory_space<vmem>>, vector<16x68xbf16>,
    return
  }
  func.func @transform_0(%arg0: i32) -> (i32, i32) {
    %c0_i32 = arith.constant 0 : i32
    %c0_i32_0 = arith.constant 0 : i32
    return %arg0, %c0_i32 : i32, i32
  }
  func.func @transform_1(%arg0: i32) -> (i32, i32) {
    %c0_i32 = arith.constant 0 : i32
    %c0_i32_0 = arith.constant 0 : i32
    return %arg0, %c0_i32 : i32, i32
  }
  func.func @transform_2(%arg0: i32) -> (i32, i32) {
    %c0_i32 = arith.constant 0 : i32
    %c0_i32_0 = arith.constant 0 : i32
    return %arg0, %c0_i32 : i32, i32
  }
  func.func @transform_3(%arg0: i32) -> (i32, i32) {
    %c0_i32 = arith.constant 0 : i32
    %c0_i32_0 = arith.constant 0 : i32
    return %arg0, %c0_i32 : i32, i32
  }
  func.func @transform_4(%arg0: i32) -> (i32, i32) {
    %c0_i32 = arith.constant 0 : i32
    %c0_i32_0 = arith.constant 0 : i32
    %c0_i32_1 = arith.constant 0 : i32
    return %c0_i32, %c0_i32_0 : i32, i32
  }
  func.func @transform_5(%arg0: i32) -> (i32, i32) {
    %c0_i32 = arith.constant 0 : i32
    %c0_i32_0 = arith.constant 0 : i32
    return %arg0, %c0_i32 : i32, i32
  }
  func.func @transform_6(%arg0: i32) -> (i32, i32) {
    %c0_i32 = arith.constant 0 : i32
    %c0_i32_0 = arith.constant 0 : i32
    return %arg0, %c0_i32 : i32, i32
  }
}

</mosaic_0001>

<llo_original>
// kernel: unet_up_block_forward.3
$region0: #{unet_up_block_forward.3}
  #allocation0 [shape = 'u32[]', space=smem, size = 0x4, offset = 0x4, fixed_abs, tag = 'smem constant byte address 0x4 - core index']
  #allocation1 [shape = 'u32[72,128]{1,0:T(1,128)}', space=vmem, size = 0x9000, scoped, tag = 'internal scratch']
  %s0 = inlined_call_operand.vmem [shape: bf16[8,8,34], index: 0, kind: input, shape index: {}]
  %s1 = inlined_call_operand.vmem [shape: bf16[8,8,34], index: 1, kind: input, shape index: {}]
  %s2 = inlined_call_operand.vmem [shape: bf16[3,16,8], index: 2, kind: input, shape index: {}]
  %s3 = inlined_call_operand.vmem [shape: bf16[3,16,8], index: 3, kind: input, shape index: {}]
  %s4 = inlined_call_operand.vmem [shape: f32[16,1], index: 4, kind: input, shape index: {}]
  %s5 = inlined_call_operand.hbm [shape: f32[8,8,32], index: 5, kind: output, shape index: {}]
  %s6 = sld [smem:[#allocation0]]
  $region53: #{unet_up_block_forward.3} parent=0
    _
  %s8 = ssub.s32 1, %s6
  %s9 = scalar_select 0, %s8, %s6
  $region1: #{unet_up_block_forward.3} parent=0
    #allocation2 [shape = 'u8[8192]{0}', space=vmem, size = 0x2000, scoped, tag = 'output window, operand 0']
    #allocation3 [shape = 's32[2]{0}', space=sflag, size = 0x8, scoped, tag = 'scoped memory for unet_up_block_forward.3']
    %10 = vsyncpa [#allocation3], 0
    %s11 = scalar_lea.sflag [#allocation3], 1
    %12 = vsyncpa %s11, 0
    loop: start=0, step=1, limit=10
    $region2: #{unet_up_block_forward.3} parent=1 // loop_pre_header
      _
    $region3: #{unet_up_block_forward.3} parent=1 // loop_header
      %s14 = sphi 0, %s18
      %p15 = scmp.ge.s32.totalorder %s14, 10
      %s24 = sphi 0, %s26
      %s27 = sphi 0, %s24
      %s28 = sphi 0, %s27
      %s44 = sphi 0, %s28
      %s50 = sphi 0, %s52
      %s53 = sphi 0, %s50
      %s54 = sphi 0, %s53
      %s70 = sphi 0, %s54
      %s74 = sphi 0, %s74
      %s76 = sphi 0, %s74
      %s77 = sphi 0, %s76
      %s91 = sphi 0, %s77
      %s95 = sphi 0, %s95
      %s97 = sphi 0, %s95
      %s98 = sphi 0, %s97
      %s112 = sphi 0, %s98
      %s116 = sphi 0, %s116
      %s118 = sphi 0, %s116
      %s119 = sphi 0, %s118
      %s133 = sphi 0, %s119
      %s139 = sphi 0, %s141
      %s142 = sphi 0, %s139
      %s143 = sphi 0, %s142
      %s159 = sphi 0, %s143
    $region4: #{unet_up_block_forward.3} parent=1 // loop_header_branch
      %17 = sbr.rel (%p15) target = $region8
    $region5: #{unet_up_block_forward.3} parent=1 // loop_body
      %s19 = ssub.s32 %s14, 1
      %s20 = ssub.s32 %s14, 2
      %s21 = sadd.s32 %s14, 1
      %s22 = ssub.s32 %s14, %s21
      %p23 = scmp.eq.s32.totalorder %s22, 0
      %s25 = sadd.s32 %s24, 1
      %s26 = scalar_select %p23, %s24, %s25
      %p29 = pneg %p23
      %p30 = scmp.eq.s32.totalorder %s14, 7
      %p31 = por %p29, %p30
      %p32 = scmp.ne.s32.totalorder %s24, %s27
      %p33 = scmp.eq.s32.totalorder %s14, 0
      %p34 = por %p32, %p33
      %p35 = scmp.ne.s32.totalorder %s24, %s27
      %p36 = scmp.eq.s32.totalorder %s19, 7
      %p37 = por %p35, %p36
      %p38 = scmp.ne.s32.totalorder %s27, %s28
      %p39 = scmp.eq.s32.totalorder %s19, 0
      %p40 = por %p38, %p39
      %p41 = scmp.ne.s32.totalorder %s27, %s28
      %p42 = scmp.eq.s32.totalorder %s20, 7
      %p43 = por %p41, %p42
      %p45 = scmp.ne.s32.totalorder %s28, %s44
      %p46 = scmp.eq.s32.totalorder %s20, 0
      %p47 = por %p45, %p46
      %s48 = ssub.s32 %s14, %s21
      %p49 = scmp.eq.s32.totalorder %s48, 0
      %s51 = sadd.s32 %s50, 1
      %s52 = scalar_select %p49, %s50, %s51
      %p55 = pneg %p49
      %p56 = scmp.eq.s32.totalorder %s14, 7
      %p57 = por %p55, %p56
      %p58 = scmp.ne.s32.totalorder %s50, %s53
      %p59 = scmp.eq.s32.totalorder %s14, 0
      %p60 = por %p58, %p59
      %p61 = scmp.ne.s32.totalorder %s50, %s53
      %p62 = scmp.eq.s32.totalorder %s19, 7
      %p63 = por %p61, %p62
      %p64 = scmp.ne.s32.totalorder %s53, %s54
      %p65 = scmp.eq.s32.totalorder %s19, 0
      %p66 = por %p64, %p65
      %p67 = scmp.ne.s32.totalorder %s53, %s54
      %p68 = scmp.eq.s32.totalorder %s20, 7
      %p69 = por %p67, %p68
      %p71 = scmp.ne.s32.totalorder %s54, %s70
      %p72 = scmp.eq.s32.totalorder %s20, 0
      %p73 = por %p71, %p72
      %s75 = sadd.s32 %s74, 1
      %p78 = scmp.eq.s32.totalorder %s14, 7
      %p79 = scmp.ne.s32.totalorder %s74, %s76
      %p80 = scmp.eq.s32.totalorder %s14, 0
      %p81 = por %p79, %p80
      %p82 = scmp.ne.s32.totalorder %s74, %s76
      %p83 = scmp.eq.s32.totalorder %s19, 7
      %p84 = por %p82, %p83
      %p85 = scmp.ne.s32.totalorder %s76, %s77
      %p86 = scmp.eq.s32.totalorder %s19, 0
      %p87 = por %p85, %p86
      %p88 = scmp.ne.s32.totalorder %s76, %s77
      %p89 = scmp.eq.s32.totalorder %s20, 7
      %p90 = por %p88, %p89
      %p92 = scmp.ne.s32.totalorder %s77, %s91
      %p93 = scmp.eq.s32.totalorder %s20, 0
      %p94 = por %p92, %p93
      %s96 = sadd.s32 %s95, 1
      %p99 = scmp.eq.s32.totalorder %s14, 7
      %p100 = scmp.ne.s32.totalorder %s95, %s97
      %p101 = scmp.eq.s32.totalorder %s14, 0
      %p102 = por %p100, %p101
      %p103 = scmp.ne.s32.totalorder %s95, %s97
      %p104 = scmp.eq.s32.totalorder %s19, 7
      %p105 = por %p103, %p104
      %p106 = scmp.ne.s32.totalorder %s97, %s98
      %p107 = scmp.eq.s32.totalorder %s19, 0
      %p108 = por %p106, %p107
      %p109 = scmp.ne.s32.totalorder %s97, %s98
      %p110 = scmp.eq.s32.totalorder %s20, 7
      %p111 = por %p109, %p110
      %p113 = scmp.ne.s32.totalorder %s98, %s112
      %p114 = scmp.eq.s32.totalorder %s20, 0
      %p115 = por %p113, %p114
      %s117 = sadd.s32 %s116, 1
      %p120 = scmp.eq.s32.totalorder %s14, 7
      %p121 = scmp.ne.s32.totalorder %s116, %s118
      %p122 = scmp.eq.s32.totalorder %s14, 0
      %p123 = por %p121, %p122
      %p124 = scmp.ne.s32.totalorder %s116, %s118
      %p125 = scmp.eq.s32.totalorder %s19, 7
      %p126 = por %p124, %p125
      %p127 = scmp.ne.s32.totalorder %s118, %s119
      %p128 = scmp.eq.s32.totalorder %s19, 0
      %p129 = por %p127, %p128
      %p130 = scmp.ne.s32.totalorder %s118, %s119
      %p131 = scmp.eq.s32.totalorder %s20, 7
      %p132 = por %p130, %p131
      %p134 = scmp.ne.s32.totalorder %s119, %s133
      %p135 = scmp.eq.s32.totalorder %s20, 0
      %p136 = por %p134, %p135
      %s137 = ssub.s32 %s14, %s21
      %p138 = scmp.eq.s32.totalorder %s137, 0
      %s140 = sadd.s32 %s139, 1
      %s141 = scalar_select %p138, %s139, %s140
      %p144 = pneg %p138
      %p145 = scmp.eq.s32.totalorder %s14, 7
      %p146 = por %p144, %p145
      %p147 = scmp.ne.s32.totalorder %s139, %s142
      %p148 = scmp.eq.s32.totalorder %s14, 0
      %p149 = por %p147, %p148
      %p150 = scmp.ne.s32.totalorder %s139, %s142
      %p151 = scmp.eq.s32.totalorder %s19, 7
      %p152 = por %p150, %p151
      %p153 = scmp.ne.s32.totalorder %s142, %s143
      %p154 = scmp.eq.s32.totalorder %s19, 0
      %p155 = por %p153, %p154
      %p156 = scmp.ne.s32.totalorder %s142, %s143
      %p157 = scmp.eq.s32.totalorder %s20, 7
      %p158 = por %p156, %p157
      %p160 = scmp.ne.s32.totalorder %s143, %s159
      %p161 = scmp.eq.s32.totalorder %s20, 0
      %p162 = por %p160, %p161
      %p163 = scmp.le.s32.totalorder 1, %s14
      %p164 = scmp.lt.s32.totalorder %s14, 9
      %p165 = pnand %p163, %p164
      %p166 = pneg %p165
      // Predicated region
      $region9: #{unet_up_block_forward.3} parent=5 // pred_check
        _
      $region10: #{unet_up_block_forward.3} parent=5 // pred_check_branch
        %168 = sbr.rel (%p165) target = $region12
      $region11: #{unet_up_block_forward.3} parent=5 // pred_region
        %s169 = ssub.s32 %s14, 1
        // Predicated region
        $region13: #{unet_up_block_forward.3} parent=11 // pred_check
          %p170 = pneg %p87
        $region14: #{unet_up_block_forward.3} parent=11 // pred_check_branch
          %172 = sbr.rel (%p170) target = $region16
        $region15: #{unet_up_block_forward.3} parent=11 // pred_region
          _
        $region16: #{unet_up_block_forward.3} parent=11 // pred_fallthru
          _
        // Predicated region
        $region17: #{unet_up_block_forward.3} parent=11 // pred_check
          %p173 = pneg %p108
        $region18: #{unet_up_block_forward.3} parent=11 // pred_check_branch
          %175 = sbr.rel (%p173) target = $region20
        $region19: #{unet_up_block_forward.3} parent=11 // pred_region
          _
        $region20: #{unet_up_block_forward.3} parent=11 // pred_fallthru
          _
        // Predicated region
        $region21: #{unet_up_block_forward.3} parent=11 // pred_check
          %p176 = pneg %p129
        $region22: #{unet_up_block_forward.3} parent=11 // pred_check_branch
          %178 = sbr.rel (%p176) target = $region24
        $region23: #{unet_up_block_forward.3} parent=11 // pred_region
          _
        $region24: #{unet_up_block_forward.3} parent=11 // pred_fallthru
          _
      $region12: #{unet_up_block_forward.3} parent=5 // pred_fallthru
        _
      %p179 = scmp.lt.s32.totalorder %s14, 8
      // Predicated region
      $region25: #{unet_up_block_forward.3} parent=5 // pred_check
        %p180 = pneg %p179
      $region26: #{unet_up_block_forward.3} parent=5 // pred_check_branch
        %182 = sbr.rel (%p180) target = $region28
      $region27: #{unet_up_block_forward.3} parent=5 // pred_region
        // Predicated region
        $region29: #{unet_up_block_forward.3} parent=27 // pred_check
          %p183 = pneg %p34
        $region30: #{unet_up_block_forward.3} parent=27 // pred_check_branch
          %185 = sbr.rel (%p183) target = $region32
        $region31: #{unet_up_block_forward.3} parent=27 // pred_region
          %p186 = scmp.lt.s32.totalorder %s14, 7
          %s187 = scalar_select %p186, %s14, 7
          %s188 = smul.addr %s187, 4
          %s189 = scalar_lea.vmem %s0, %s188
        $region32: #{unet_up_block_forward.3} parent=27 // pred_fallthru
          _
        // Predicated region
        $region33: #{unet_up_block_forward.3} parent=27 // pred_check
          %p190 = pneg %p60
        $region34: #{unet_up_block_forward.3} parent=27 // pred_check_branch
          %192 = sbr.rel (%p190) target = $region36
        $region35: #{unet_up_block_forward.3} parent=27 // pred_region
          %p193 = scmp.lt.s32.totalorder %s14, 7
          %s194 = scalar_select %p193, %s14, 7
          %s195 = smul.addr %s194, 4
          %s196 = scalar_lea.vmem %s1, %s195
        $region36: #{unet_up_block_forward.3} parent=27 // pred_fallthru
          _
      $region28: #{unet_up_block_forward.3} parent=5 // pred_fallthru
        _
      %p197 = scmp.le.s32.totalorder 1, %s14
      %p198 = scmp.lt.s32.totalorder %s14, 9
      %p199 = pnand %p197, %p198
      %p200 = pneg %p199
      // Predicated region
      $region37: #{unet_up_block_forward.3} parent=5 // pred_check
        _
      $region38: #{unet_up_block_forward.3} parent=5 // pred_check_branch
        %202 = sbr.rel (%p199) target = $region40
      $region39: #{unet_up_block_forward.3} parent=5 // pred_region
        %s203 = ssub.s32 %s14, 1
        %p204 = scmp.lt.s32.totalorder %s19, 7
        %s205 = scalar_select %p204, %s19, 7
        %s206 = smul.addr %s205, 4
        %s207 = scalar_lea.vmem %s0, %s206
        %p208 = pneg %p40
        %p209 = pneg %p37
        %p210 = scmp.lt.s32.totalorder %s19, 7
        %s211 = scalar_select %p210, %s19, 7
        %s212 = smul.addr %s211, 4
        %s213 = scalar_lea.vmem %s1, %s212
        %p214 = pneg %p66
        %p215 = pneg %p63
        %p216 = pneg %p87
        %p217 = pneg %p84
        %p218 = pneg %p108
        %p219 = pneg %p105
        %p220 = pneg %p129
        %p221 = pneg %p126
        %p222 = pneg %p155
        %p223 = pneg %p152
        %s224 = sand.u32 %s142, 1
        %s225 = scalar_lea.sflag [#allocation3], %s224
        %s226 = sand.u32 %s142, 1
        %s227 = smul.addr %s226, 8
        %s228 = scalar_lea.vmem [#allocation2], %s227
        %p229 = scmp.lt.s32.totalorder %s19, 7
        %s230 = scalar_select %p229, %s19, 7
        %s231 = smul.addr %s230, 4
        %s232 = scalar_lea.vmem %s0, %s231
        %p233 = scmp.lt.s32.totalorder %s19, 7
        %s234 = scalar_select %p233, %s19, 7
        %s235 = smul.addr %s234, 4
        %s236 = scalar_lea.vmem %s1, %s235
        %v238 = vld [vmem:[%s232] sm:$0xf]
        %v239 = vld [vmem:[%s236] sm:$0xf]
        %v240 = vld [vmem:[%s2] sm:$0xf]
        %v241 = vld [vmem:[%s2 + $0x4] sm:$0xf]
        %v242 = vld [vmem:[%s3] sm:$0xf]
        %v243 = vld [vmem:[%s3 + $0x4] sm:$0xf]
        %v246 = vunpack.c.l.b16 %v242
        %v247 = vunpack.c.l.b16 %v243
        %v248 = vpack.c.b16 %v247, %v246
        %vm249 = vcmask 64512
        %v251 = vsel %vm249, %v248, 0
        %vm253 = vcmask 1043456
        %v255 = vsel %vm253, %v239, 0
        %257 = vmatpush.bf16.msra.mxu0 0
        %258 = vmatpush.bf16.msra.mxu0 0
        %259 = vmatpush.bf16.msra.mxu0 0
        %260 = vmatpush.bf16.msra.mxu0 0
        %261 = vmatpush.bf16.msra.mxu0 0
        %262 = vmatpush.bf16.msra.mxu0 0
        %263 = vmatpush.bf16.msra.mxu0 0
        %264 = vmatpush.bf16.msra.mxu0 %v255
        %265 = vmatmul.bf16.gmra.mxu0 %v251
        %v266 = vpop.f32.mrf.mxu0
        %v267 = vadd.f32 0.0, %v266
        %v268 = vpop.f32.mrf.mxu0
        %269 = vdwg.mxu0
        %v272 = vunpack.c.l.b16 %v240
        %v273 = vunpack.c.l.b16 %v241
        %v274 = vpack.c.b16 %v273, %v272
        %v276 = vsel %vm249, %v274, 0
        %v279 = vsel %vm253, %v238, 0
        %281 = vmatpush.bf16.msra.mxu0 0
        %282 = vmatpush.bf16.msra.mxu0 0
        %283 = vmatpush.bf16.msra.mxu0 0
        %284 = vmatpush.bf16.msra.mxu0 0
        %285 = vmatpush.bf16.msra.mxu0 0
        %286 = vmatpush.bf16.msra.mxu0 0
        %287 = vmatpush.bf16.msra.mxu0 0
        %288 = vmatpush.bf16.msra.mxu0 %v279
        %289 = vmatmul.bf16.gmra.mxu0 %v276
        %v290 = vpop.f32.mrf.mxu0
        %v291 = vadd.f32 %v267, %v290
        %v292 = vpop.f32.mrf.mxu0
        %293 = vdwg.mxu0
        %s294 = scalar_lea.vmem %s2, 8
        %v295 = vld [vmem:[%s294] sm:$0xf]
        %v296 = vld [vmem:[%s294 + $0x4] sm:$0xf]
        %v299 = vunpack.c.l.b16 %v295
        %v300 = vunpack.c.l.b16 %v296
        %v301 = vpack.c.b16 %v300, %v299
        %v303 = vunpack.c.l.b16 %v238
        %v304 = vpack.c.b16 %v303, %v303
        %305 = vrot.lane.b32.xlu0 %v304, 127
        %v306 = vpop.permute.xlu0 %305
        %v308 = vsel %vm249, %v301, 0
        %v311 = vsel %vm253, %v306, 0
        %313 = vmatpush.bf16.msra.mxu0 0
        %314 = vmatpush.bf16.msra.mxu0 0
        %315 = vmatpush.bf16.msra.mxu0 0
        %316 = vmatpush.bf16.msra.mxu0 0
        %317 = vmatpush.bf16.msra.mxu0 0
        %318 = vmatpush.bf16.msra.mxu0 0
        %319 = vmatpush.bf16.msra.mxu0 0
        %320 = vmatpush.bf16.msra.mxu0 %v311
        %321 = vmatmul.bf16.gmra.mxu0 %v308
        %v322 = vpop.f32.mrf.mxu0
        %v323 = vadd.f32 0.0, %v322
        %v324 = vpop.f32.mrf.mxu0
        %325 = vdwg.mxu0
        %v326 = vadd.f32 %v291, %v323
        %s327 = scalar_lea.vmem %s3, 8
        %v328 = vld [vmem:[%s327] sm:$0xf]
        %v329 = vld [vmem:[%s327 + $0x4] sm:$0xf]
        %v332 = vunpack.c.l.b16 %v328
        %v333 = vunpack.c.l.b16 %v329
        %v334 = vpack.c.b16 %v333, %v332
        %v336 = vunpack.c.l.b16 %v239
        %v337 = vpack.c.b16 %v336, %v336
        %338 = vrot.lane.b32.xlu0 %v337, 127
        %v339 = vpop.permute.xlu0 %338
        %v341 = vsel %vm249, %v334, 0
        %v344 = vsel %vm253, %v339, 0
        %346 = vmatpush.bf16.msra.mxu0 0
        %347 = vmatpush.bf16.msra.mxu0 0
        %348 = vmatpush.bf16.msra.mxu0 0
        %349 = vmatpush.bf16.msra.mxu0 0
        %350 = vmatpush.bf16.msra.mxu0 0
        %351 = vmatpush.bf16.msra.mxu0 0
        %352 = vmatpush.bf16.msra.mxu0 0
        %353 = vmatpush.bf16.msra.mxu0 %v344
        %354 = vmatmul.bf16.gmra.mxu0 %v341
        %v355 = vpop.f32.mrf.mxu0
        %v356 = vadd.f32 0.0, %v355
        %v357 = vpop.f32.mrf.mxu0
        %358 = vdwg.mxu0
        %v359 = vadd.f32 %v326, %v356
        %s360 = scalar_lea.vmem %s2, 16
        %v361 = vld [vmem:[%s360] sm:$0xf]
        %v362 = vld [vmem:[%s360 + $0x4] sm:$0xf]
        %v365 = vunpack.c.l.b16 %v361
        %v366 = vunpack.c.l.b16 %v362
        %v367 = vpack.c.b16 %v366, %v365
        %368 = vrot.lane.b32.xlu0 %v304, 126
        %v369 = vpop.permute.xlu0 %368
        %v371 = vsel %vm249, %v367, 0
        %v374 = vsel %vm253, %v369, 0
        %376 = vmatpush.bf16.msra.mxu0 0
        %377 = vmatpush.bf16.msra.mxu0 0
        %378 = vmatpush.bf16.msra.mxu0 0
        %379 = vmatpush.bf16.msra.mxu0 0
        %380 = vmatpush.bf16.msra.mxu0 0
        %381 = vmatpush.bf16.msra.mxu0 0
        %382 = vmatpush.bf16.msra.mxu0 0
        %383 = vmatpush.bf16.msra.mxu0 %v374
        %384 = vmatmul.bf16.gmra.mxu0 %v371
        %v385 = vpop.f32.mrf.mxu0
        %v386 = vadd.f32 0.0, %v385
        %v387 = vpop.f32.mrf.mxu0
        %388 = vdwg.mxu0
        %v389 = vadd.f32 %v359, %v386
        %s390 = scalar_lea.vmem %s3, 16
        %v391 = vld [vmem:[%s390] sm:$0xf]
        %v392 = vld [vmem:[%s390 + $0x4] sm:$0xf]
        %v395 = vunpack.c.l.b16 %v391
        %v396 = vunpack.c.l.b16 %v392
        %v397 = vpack.c.b16 %v396, %v395
        %398 = vrot.lane.b32.xlu0 %v337, 126
        %v399 = vpop.permute.xlu0 %398
        %v401 = vsel %vm249, %v397, 0
        %v404 = vsel %vm253, %v399, 0
        %406 = vmatpush.bf16.msra.mxu0 0
        %407 = vmatpush.bf16.msra.mxu0 0
        %408 = vmatpush.bf16.msra.mxu0 0
        %409 = vmatpush.bf16.msra.mxu0 0
        %410 = vmatpush.bf16.msra.mxu0 0
        %411 = vmatpush.bf16.msra.mxu0 0
        %412 = vmatpush.bf16.msra.mxu0 0
        %413 = vmatpush.bf16.msra.mxu0 %v404
        %414 = vmatmul.bf16.gmra.mxu0 %v401
        %v415 = vpop.f32.mrf.mxu0
        %v416 = vadd.f32 0.0, %v415
        %v417 = vpop.f32.mrf.mxu0
        %418 = vdwg.mxu0
        %v419 = vadd.f32 %v389, %v416
        %v420 = vld [vmem:[%s4] sm:$0xff]
        %422 = vset.pattern.permute.xlu0 0
        %423 = vperm.xlu0 %422, %v420
        %v424 = vpop.permute.xlu0 %423
        %v426 = vadd.f32 %v419, %v424
        %vm427 = vcmp.ge.f32.partialorder %v426, 0.0
        %v428 = vmul.f32 %v426, 0.01
        %v429 = vsel %vm427, %v426, %v428
        %vm430 = vcmask 261120
        %431 = vst.msk [vmem:[%s228] sm:$0xff] %vm430, %v429
        %s432 = sand.u32 %s142, 1
        %s433 = scalar_lea.sflag [#allocation3], %s432
        %s434 = sand.u32 %s142, 1
        %s435 = smul.addr %s434, 8
        %s436 = scalar_lea.vmem [#allocation2], %s435
        // Predicated region
        $region41: #{unet_up_block_forward.3} parent=39 // pred_check
          %p437 = pneg %p152
        $region42: #{unet_up_block_forward.3} parent=39 // pred_check_branch
          %439 = sbr.rel (%p437) target = $region44
        $region43: #{unet_up_block_forward.3} parent=39 // pred_region
          %441 = vsyncadd %s433, 0
          %s442 = smul.addr %s19, 8
          %s443 = scalar_lea.hbm %s5, %s442
          %s445 = sshll.u32 %s436, 4
          %s446 = int_to_ptr.vmem [resolvable:$true] %s445
          %s447 = sshll.u32 %s443, 4
          %s448 = int_to_ptr.hbm [resolvable:$true] %s447
          %450 = dma.vmem_to_hbm [thread:$0]  %s446, 128, %s448, %s433
        $region44: #{unet_up_block_forward.3} parent=39 // pred_fallthru
          _
      $region40: #{unet_up_block_forward.3} parent=5 // pred_fallthru
        _
      %p451 = scmp.le.s32.totalorder 2, %s14
      // Predicated region
      $region45: #{unet_up_block_forward.3} parent=5 // pred_check
        %p452 = pneg %p451
      $region46: #{unet_up_block_forward.3} parent=5 // pred_check_branch
        %454 = sbr.rel (%p452) target = $region48
      $region47: #{unet_up_block_forward.3} parent=5 // pred_region
        %s455 = ssub.s32 %s14, 2
        // Predicated region
        $region49: #{unet_up_block_forward.3} parent=47 // pred_check
          %p456 = pneg %p158
        $region50: #{unet_up_block_forward.3} parent=47 // pred_check_branch
          %458 = sbr.rel (%p456) target = $region52
        $region51: #{unet_up_block_forward.3} parent=47 // pred_region
          %s459 = sand.u32 %s143, 1
          %s460 = scalar_lea.sflag [#allocation3], %s459
          %s461 = sand.u32 %s143, 1
          %s462 = smul.addr %s461, 8
          %s463 = scalar_lea.vmem [#allocation2], %s462
          %465 = dma.done %s460, 128
        $region52: #{unet_up_block_forward.3} parent=47 // pred_fallthru
          _
      $region48: #{unet_up_block_forward.3} parent=5 // pred_fallthru
        _
    $region6: #{unet_up_block_forward.3} parent=1 // loop_footer
      %s18 = sadd.s32 1, %s14
    $region7: #{unet_up_block_forward.3} parent=1 // loop_footer_branch
      %13 = sbr.rel target = $region3
    $region8: #{unet_up_block_forward.3} parent=1 // loop_exit
      _
    %466 = vsyncpa [#allocation3], 1
    %s467 = scalar_lea.sflag [#allocation3], 1
    %468 = vsyncpa %s467, 1

// kernel: unet_up_block_forward.2
$region0: #{unet_up_block_forward.2}
  #allocation0 [shape = 'u32[]', space=smem, size = 0x4, offset = 0x4, fixed_abs, tag = 'smem constant byte address 0x4 - core index']
  #allocation1 [shape = 'u32[72,128]{1,0:T(1,128)}', space=vmem, size = 0x9000, scoped, tag = 'internal scratch']
  %s0 = inlined_call_operand.vmem [shape: bf16[32,16], index: 0, kind: input, shape index: {}]
  %s1 = inlined_call_operand.vmem [shape: bf16[32,16], index: 1, kind: input, shape index: {}]
  %s2 = inlined_call_operand.vmem [shape: bf16[32,16], index: 2, kind: input, shape index: {}]
  %s3 = inlined_call_operand.vmem [shape: bf16[32,16], index: 3, kind: input, shape index: {}]
  %s4 = inlined_call_operand.vmem [shape: bf16[16,102], index: 4, kind: input, shape index: {}]
  %s5 = inlined_call_operand.vmem [shape: f32[32,1], index: 5, kind: input, shape index: {}]
  %s6 = inlined_call_operand.vmem [shape: bf16[32,68], index: 6, kind: output, shape index: {}]
  %s7 = sld [smem:[#allocation0]]
  $region57: #{unet_up_block_forward.2} parent=0
    _
  %s9 = ssub.s32 1, %s7
  %s10 = scalar_select 0, %s9, %s7
  loop: start=0, step=1, limit=4
  $region2: #{unet_up_block_forward.2} parent=0 // loop_pre_header
    _
  $region3: #{unet_up_block_forward.2} parent=0 // loop_header
    %s12 = sphi 0, %s16
    %p13 = scmp.ge.s32.totalorder %s12, 4
    %s22 = sphi 0, %s24
    %s25 = sphi 0, %s22
    %s26 = sphi 0, %s25
    %s42 = sphi 0, %s26
    %s48 = sphi 0, %s50
    %s51 = sphi 0, %s48
    %s52 = sphi 0, %s51
    %s68 = sphi 0, %s52
    %s74 = sphi 0, %s76
    %s77 = sphi 0, %s74
    %s78 = sphi 0, %s77
    %s94 = sphi 0, %s78
    %s100 = sphi 0, %s102
    %s103 = sphi 0, %s100
    %s104 = sphi 0, %s103
    %s120 = sphi 0, %s104
    %s124 = sphi 0, %s124
    %s126 = sphi 0, %s124
    %s127 = sphi 0, %s126
    %s141 = sphi 0, %s127
    %s147 = sphi 0, %s149
    %s150 = sphi 0, %s147
    %s151 = sphi 0, %s150
    %s167 = sphi 0, %s151
    %s173 = sphi 0, %s175
    %s176 = sphi 0, %s173
    %s177 = sphi 0, %s176
    %s193 = sphi 0, %s177
  $region4: #{unet_up_block_forward.2} parent=0 // loop_header_branch
    %15 = sbr.rel (%p13) target = $region8
  $region5: #{unet_up_block_forward.2} parent=0 // loop_body
    %s17 = ssub.s32 %s12, 1
    %s18 = ssub.s32 %s12, 2
    %s19 = sadd.s32 %s12, 1
    %s20 = ssub.s32 %s12, %s19
    %p21 = scmp.eq.s32.totalorder %s20, 0
    %s23 = sadd.s32 %s22, 1
    %s24 = scalar_select %p21, %s22, %s23
    %p27 = pneg %p21
    %p28 = scmp.eq.s32.totalorder %s12, 1
    %p29 = por %p27, %p28
    %p30 = scmp.ne.s32.totalorder %s22, %s25
    %p31 = scmp.eq.s32.totalorder %s12, 0
    %p32 = por %p30, %p31
    %p33 = scmp.ne.s32.totalorder %s22, %s25
    %p34 = scmp.eq.s32.totalorder %s17, 1
    %p35 = por %p33, %p34
    %p36 = scmp.ne.s32.totalorder %s25, %s26
    %p37 = scmp.eq.s32.totalorder %s17, 0
    %p38 = por %p36, %p37
    %p39 = scmp.ne.s32.totalorder %s25, %s26
    %p40 = scmp.eq.s32.totalorder %s18, 1
    %p41 = por %p39, %p40
    %p43 = scmp.ne.s32.totalorder %s26, %s42
    %p44 = scmp.eq.s32.totalorder %s18, 0
    %p45 = por %p43, %p44
    %s46 = ssub.s32 %s12, %s19
    %p47 = scmp.eq.s32.totalorder %s46, 0
    %s49 = sadd.s32 %s48, 1
    %s50 = scalar_select %p47, %s48, %s49
    %p53 = pneg %p47
    %p54 = scmp.eq.s32.totalorder %s12, 1
    %p55 = por %p53, %p54
    %p56 = scmp.ne.s32.totalorder %s48, %s51
    %p57 = scmp.eq.s32.totalorder %s12, 0
    %p58 = por %p56, %p57
    %p59 = scmp.ne.s32.totalorder %s48, %s51
    %p60 = scmp.eq.s32.totalorder %s17, 1
    %p61 = por %p59, %p60
    %p62 = scmp.ne.s32.totalorder %s51, %s52
    %p63 = scmp.eq.s32.totalorder %s17, 0
    %p64 = por %p62, %p63
    %p65 = scmp.ne.s32.totalorder %s51, %s52
    %p66 = scmp.eq.s32.totalorder %s18, 1
    %p67 = por %p65, %p66
    %p69 = scmp.ne.s32.totalorder %s52, %s68
    %p70 = scmp.eq.s32.totalorder %s18, 0
    %p71 = por %p69, %p70
    %s72 = ssub.s32 %s12, %s19
    %p73 = scmp.eq.s32.totalorder %s72, 0
    %s75 = sadd.s32 %s74, 1
    %s76 = scalar_select %p73, %s74, %s75
    %p79 = pneg %p73
    %p80 = scmp.eq.s32.totalorder %s12, 1
    %p81 = por %p79, %p80
    %p82 = scmp.ne.s32.totalorder %s74, %s77
    %p83 = scmp.eq.s32.totalorder %s12, 0
    %p84 = por %p82, %p83
    %p85 = scmp.ne.s32.totalorder %s74, %s77
    %p86 = scmp.eq.s32.totalorder %s17, 1
    %p87 = por %p85, %p86
    %p88 = scmp.ne.s32.totalorder %s77, %s78
    %p89 = scmp.eq.s32.totalorder %s17, 0
    %p90 = por %p88, %p89
    %p91 = scmp.ne.s32.totalorder %s77, %s78
    %p92 = scmp.eq.s32.totalorder %s18, 1
    %p93 = por %p91, %p92
    %p95 = scmp.ne.s32.totalorder %s78, %s94
    %p96 = scmp.eq.s32.totalorder %s18, 0
    %p97 = por %p95, %p96
    %s98 = ssub.s32 %s12, %s19
    %p99 = scmp.eq.s32.totalorder %s98, 0
    %s101 = sadd.s32 %s100, 1
    %s102 = scalar_select %p99, %s100, %s101
    %p105 = pneg %p99
    %p106 = scmp.eq.s32.totalorder %s12, 1
    %p107 = por %p105, %p106
    %p108 = scmp.ne.s32.totalorder %s100, %s103
    %p109 = scmp.eq.s32.totalorder %s12, 0
    %p110 = por %p108, %p109
    %p111 = scmp.ne.s32.totalorder %s100, %s103
    %p112 = scmp.eq.s32.totalorder %s17, 1
    %p113 = por %p111, %p112
    %p114 = scmp.ne.s32.totalorder %s103, %s104
    %p115 = scmp.eq.s32.totalorder %s17, 0
    %p116 = por %p114, %p115
    %p117 = scmp.ne.s32.totalorder %s103, %s104
    %p118 = scmp.eq.s32.totalorder %s18, 1
    %p119 = por %p117, %p118
    %p121 = scmp.ne.s32.totalorder %s104, %s120
    %p122 = scmp.eq.s32.totalorder %s18, 0
    %p123 = por %p121, %p122
    %s125 = sadd.s32 %s124, 1
    %p128 = scmp.eq.s32.totalorder %s12, 1
    %p129 = scmp.ne.s32.totalorder %s124, %s126
    %p130 = scmp.eq.s32.totalorder %s12, 0
    %p131 = por %p129, %p130
    %p132 = scmp.ne.s32.totalorder %s124, %s126
    %p133 = scmp.eq.s32.totalorder %s17, 1
    %p134 = por %p132, %p133
    %p135 = scmp.ne.s32.totalorder %s126, %s127
    %p136 = scmp.eq.s32.totalorder %s17, 0
    %p137 = por %p135, %p136
    %p138 = scmp.ne.s32.totalorder %s126, %s127
    %p139 = scmp.eq.s32.totalorder %s18, 1
    %p140 = por %p138, %p139
    %p142 = scmp.ne.s32.totalorder %s127, %s141
    %p143 = scmp.eq.s32.totalorder %s18, 0
    %p144 = por %p142, %p143
    %s145 = ssub.s32 %s12, %s19
    %p146 = scmp.eq.s32.totalorder %s145, 0
    %s148 = sadd.s32 %s147, 1
    %s149 = scalar_select %p146, %s147, %s148
    %p152 = pneg %p146
    %p153 = scmp.eq.s32.totalorder %s12, 1
    %p154 = por %p152, %p153
    %p155 = scmp.ne.s32.totalorder %s147, %s150
    %p156 = scmp.eq.s32.totalorder %s12, 0
    %p157 = por %p155, %p156
    %p158 = scmp.ne.s32.totalorder %s147, %s150
    %p159 = scmp.eq.s32.totalorder %s17, 1
    %p160 = por %p158, %p159
    %p161 = scmp.ne.s32.totalorder %s150, %s151
    %p162 = scmp.eq.s32.totalorder %s17, 0
    %p163 = por %p161, %p162
    %p164 = scmp.ne.s32.totalorder %s150, %s151
    %p165 = scmp.eq.s32.totalorder %s18, 1
    %p166 = por %p164, %p165
    %p168 = scmp.ne.s32.totalorder %s151, %s167
    %p169 = scmp.eq.s32.totalorder %s18, 0
    %p170 = por %p168, %p169
    %s171 = ssub.s32 %s12, %s19
    %p172 = scmp.eq.s32.totalorder %s171, 0
    %s174 = sadd.s32 %s173, 1
    %s175 = scalar_select %p172, %s173, %s174
    %p178 = pneg %p172
    %p179 = scmp.eq.s32.totalorder %s12, 1
    %p180 = por %p178, %p179
    %p181 = scmp.ne.s32.totalorder %s173, %s176
    %p182 = scmp.eq.s32.totalorder %s12, 0
    %p183 = por %p181, %p182
    %p184 = scmp.ne.s32.totalorder %s173, %s176
    %p185 = scmp.eq.s32.totalorder %s17, 1
    %p186 = por %p184, %p185
    %p187 = scmp.ne.s32.totalorder %s176, %s177
    %p188 = scmp.eq.s32.totalorder %s17, 0
    %p189 = por %p187, %p188
    %p190 = scmp.ne.s32.totalorder %s176, %s177
    %p191 = scmp.eq.s32.totalorder %s18, 1
    %p192 = por %p190, %p191
    %p194 = scmp.ne.s32.totalorder %s177, %s193
    %p195 = scmp.eq.s32.totalorder %s18, 0
    %p196 = por %p194, %p195
    %p197 = scmp.le.s32.totalorder 1, %s12
    %p198 = scmp.lt.s32.totalorder %s12, 3
    %p199 = pnand %p197, %p198
    %p200 = pneg %p199
    // Predicated region
    $region9: #{unet_up_block_forward.2} parent=5 // pred_check
      _
    $region10: #{unet_up_block_forward.2} parent=5 // pred_check_branch
      %202 = sbr.rel (%p199) target = $region12
    $region11: #{unet_up_block_forward.2} parent=5 // pred_region
      %s203 = ssub.s32 %s12, 1
      // Predicated region
      $region13: #{unet_up_block_forward.2} parent=11 // pred_check
        %p204 = pneg %p137
      $region14: #{unet_up_block_forward.2} parent=11 // pred_check_branch
        %206 = sbr.rel (%p204) target = $region16
      $region15: #{unet_up_block_forward.2} parent=11 // pred_region
        _
      $region16: #{unet_up_block_forward.2} parent=11 // pred_fallthru
        _
    $region12: #{unet_up_block_forward.2} parent=5 // pred_fallthru
      _
    %p207 = scmp.lt.s32.totalorder %s12, 2
    // Predicated region
    $region17: #{unet_up_block_forward.2} parent=5 // pred_check
      %p208 = pneg %p207
    $region18: #{unet_up_block_forward.2} parent=5 // pred_check_branch
      %210 = sbr.rel (%p208) target = $region20
    $region19: #{unet_up_block_forward.2} parent=5 // pred_region
      // Predicated region
      $region21: #{unet_up_block_forward.2} parent=19 // pred_check
        %p211 = pneg %p32
      $region22: #{unet_up_block_forward.2} parent=19 // pred_check_branch
        %213 = sbr.rel (%p211) target = $region24
      $region23: #{unet_up_block_forward.2} parent=19 // pred_region
        %s214 = smul.u32 2, %s12
        %p215 = scmp.lt.s32.totalorder %s214, 3
        %s216 = scalar_select %p215, %s214, 3
        %s217 = smul.addr %s216, 4
        %s218 = scalar_lea.vmem %s0, %s217
        %s219 = smul.u32 2, %s12
      $region24: #{unet_up_block_forward.2} parent=19 // pred_fallthru
        _
      // Predicated region
      $region25: #{unet_up_block_forward.2} parent=19 // pred_check
        %p220 = pneg %p58
      $region26: #{unet_up_block_forward.2} parent=19 // pred_check_branch
        %222 = sbr.rel (%p220) target = $region28
      $region27: #{unet_up_block_forward.2} parent=19 // pred_region
        %s223 = smul.u32 2, %s12
        %p224 = scmp.lt.s32.totalorder %s223, 3
        %s225 = scalar_select %p224, %s223, 3
        %s226 = smul.addr %s225, 4
        %s227 = scalar_lea.vmem %s1, %s226
        %s228 = smul.u32 2, %s12
      $region28: #{unet_up_block_forward.2} parent=19 // pred_fallthru
        _
      // Predicated region
      $region29: #{unet_up_block_forward.2} parent=19 // pred_check
        %p229 = pneg %p84
      $region30: #{unet_up_block_forward.2} parent=19 // pred_check_branch
        %231 = sbr.rel (%p229) target = $region32
      $region31: #{unet_up_block_forward.2} parent=19 // pred_region
        %s232 = smul.u32 2, %s12
        %p233 = scmp.lt.s32.totalorder %s232, 3
        %s234 = scalar_select %p233, %s232, 3
        %s235 = smul.addr %s234, 4
        %s236 = scalar_lea.vmem %s2, %s235
        %s237 = smul.u32 2, %s12
      $region32: #{unet_up_block_forward.2} parent=19 // pred_fallthru
        _
      // Predicated region
      $region33: #{unet_up_block_forward.2} parent=19 // pred_check
        %p238 = pneg %p110
      $region34: #{unet_up_block_forward.2} parent=19 // pred_check_branch
        %240 = sbr.rel (%p238) target = $region36
      $region35: #{unet_up_block_forward.2} parent=19 // pred_region
        %s241 = smul.u32 2, %s12
        %p242 = scmp.lt.s32.totalorder %s241, 3
        %s243 = scalar_select %p242, %s241, 3
        %s244 = smul.addr %s243, 4
        %s245 = scalar_lea.vmem %s3, %s244
        %s246 = smul.u32 2, %s12
      $region36: #{unet_up_block_forward.2} parent=19 // pred_fallthru
        _
      // Predicated region
      $region37: #{unet_up_block_forward.2} parent=19 // pred_check
        %p247 = pneg %p157
      $region38: #{unet_up_block_forward.2} parent=19 // pred_check_branch
        %249 = sbr.rel (%p247) target = $region40
      $region39: #{unet_up_block_forward.2} parent=19 // pred_region
        %s250 = smul.u32 2, %s12
        %p251 = scmp.lt.s32.totalorder %s250, 3
        %s252 = scalar_select %p251, %s250, 3
        %s253 = smul.addr %s252, 8
        %s254 = scalar_lea.vmem %s5, %s253
        %s255 = smul.u32 2, %s12
      $region40: #{unet_up_block_forward.2} parent=19 // pred_fallthru
        _
    $region20: #{unet_up_block_forward.2} parent=5 // pred_fallthru
      _
    %p256 = scmp.le.s32.totalorder 1, %s12
    %p257 = scmp.lt.s32.totalorder %s12, 3
    %p258 = pnand %p256, %p257
    %p259 = pneg %p258
    // Predicated region
    $region41: #{unet_up_block_forward.2} parent=5 // pred_check
      _
    $region42: #{unet_up_block_forward.2} parent=5 // pred_check_branch
      %261 = sbr.rel (%p258) target = $region44
    $region43: #{unet_up_block_forward.2} parent=5 // pred_region
      %s262 = ssub.s32 %s12, 1
      %s263 = smul.u32 2, %s17
      %p264 = scmp.lt.s32.totalorder %s263, 3
      %s265 = scalar_select %p264, %s263, 3
      %s266 = smul.addr %s265, 4
      %s267 = scalar_lea.vmem %s0, %s266
      %p268 = pneg %p38
      %p269 = pneg %p35
      %s270 = smul.u32 2, %s17
      %p271 = scmp.lt.s32.totalorder %s270, 3
      %s272 = scalar_select %p271, %s270, 3
      %s273 = smul.addr %s272, 4
      %s274 = scalar_lea.vmem %s1, %s273
      %p275 = pneg %p64
      %p276 = pneg %p61
      %s277 = smul.u32 2, %s17
      %p278 = scmp.lt.s32.totalorder %s277, 3
      %s279 = scalar_select %p278, %s277, 3
      %s280 = smul.addr %s279, 4
      %s281 = scalar_lea.vmem %s2, %s280
      %p282 = pneg %p90
      %p283 = pneg %p87
      %s284 = smul.u32 2, %s17
      %p285 = scmp.lt.s32.totalorder %s284, 3
      %s286 = scalar_select %p285, %s284, 3
      %s287 = smul.addr %s286, 4
      %s288 = scalar_lea.vmem %s3, %s287
      %p289 = pneg %p116
      %p290 = pneg %p113
      %p291 = pneg %p137
      %p292 = pneg %p134
      %s293 = smul.u32 2, %s17
      %p294 = scmp.lt.s32.totalorder %s293, 3
      %s295 = scalar_select %p294, %s293, 3
      %s296 = smul.addr %s295, 8
      %s297 = scalar_lea.vmem %s5, %s296
      %p298 = pneg %p163
      %p299 = pneg %p160
      %p300 = pneg %p189
      %p301 = pneg %p186
      %s302 = smul.u32 2, %s17
      %p303 = scmp.lt.s32.totalorder %s302, 3
      %s304 = scalar_select %p303, %s302, 3
      %s305 = smul.addr %s304, 4
      %s306 = scalar_lea.vmem %s6, %s305
      %s307 = smul.u32 2, %s17
      %p308 = scmp.lt.s32.totalorder %s307, 3
      %s309 = scalar_select %p308, %s307, 3
      %s310 = smul.addr %s309, 4
      %s311 = scalar_lea.vmem %s0, %s310
      %s312 = smul.u32 2, %s17
      %s313 = smul.u32 2, %s17
      %p314 = scmp.lt.s32.totalorder %s313, 3
      %s315 = scalar_select %p314, %s313, 3
      %s316 = smul.addr %s315, 4
      %s317 = scalar_lea.vmem %s1, %s316
      %s318 = smul.u32 2, %s17
      %s319 = smul.u32 2, %s17
      %p320 = scmp.lt.s32.totalorder %s319, 3
      %s321 = scalar_select %p320, %s319, 3
      %s322 = smul.addr %s321, 4
      %s323 = scalar_lea.vmem %s2, %s322
      %s324 = smul.u32 2, %s17
      %s325 = smul.u32 2, %s17
      %p326 = scmp.lt.s32.totalorder %s325, 3
      %s327 = scalar_select %p326, %s325, 3
      %s328 = smul.addr %s327, 4
      %s329 = scalar_lea.vmem %s3, %s328
      %s330 = smul.u32 2, %s17
      %s331 = smul.u32 2, %s17
      %p332 = scmp.lt.s32.totalorder %s331, 3
      %s333 = scalar_select %p332, %s331, 3
      %s334 = smul.addr %s333, 8
      %s335 = scalar_lea.vmem %s5, %s334
      %s336 = smul.u32 2, %s17
      %s337 = smul.u32 2, %s17
      %p338 = scmp.lt.s32.totalorder %s337, 3
      %s339 = scalar_select %p338, %s337, 3
      %s340 = smul.addr %s339, 4
      %s341 = scalar_lea.vmem %s6, %s340
      %s342 = smul.u32 2, %s17
      %v344 = vld [vmem:[%s4] sm:$0xf]
      %v345 = vld [vmem:[%s4 + $0x4] sm:$0xf]
      %v346 = vld [vmem:[%s311] sm:$0xf]
      %v347 = vld [vmem:[%s311 + $0x4] sm:$0xf]
      %v348 = vld [vmem:[%s317] sm:$0xf]
      %v349 = vld [vmem:[%s317 + $0x4] sm:$0xf]
      %v352 = vunpack.c.l.b16 %v348
      %v353 = vunpack.c.l.b16 %v349
      %v354 = vpack.c.b16 %v353, %v352
      %v357 = vunpack.c.l.b16 %v344
      %v358 = vunpack.c.l.b16 %v345
      %v359 = vpack.c.b16 %v358, %v357
      %360 = vrot.lane.b32.xlu0 %v359, 127
      %v361 = vpop.permute.xlu0 %360
      %vm363 = vcmask 130048
      %v365 = vsel %vm363, %v354, 0
      %367 = vmatpush.bf16.msra.mxu0 0
      %368 = vmatpush.bf16.msra.mxu0 0
      %369 = vmatpush.bf16.msra.mxu0 0
      %370 = vmatpush.bf16.msra.mxu0 0
      %371 = vmatpush.bf16.msra.mxu0 0
      %372 = vmatpush.bf16.msra.mxu0 0
      %373 = vmatpush.bf16.msra.mxu0 0
      %374 = vmatpush.bf16.msra.mxu0 %v361
      %375 = vmatmul.bf16.gmra.mxu0 %v365
      %v376 = vpop.f32.mrf.mxu0
      %v377 = vadd.f32 0.0, %v376
      %v378 = vpop.f32.mrf.mxu0
      %v379 = vadd.f32 0.0, %v378
      %380 = vdwg.mxu0
      %v383 = vunpack.c.l.b16 %v346
      %v384 = vunpack.c.l.b16 %v347
      %v385 = vpack.c.b16 %v384, %v383
      %v388 = vsel %vm363, %v385, 0
      %390 = vmatpush.bf16.msra.mxu0 0
      %391 = vmatpush.bf16.msra.mxu0 0
      %392 = vmatpush.bf16.msra.mxu0 0
      %393 = vmatpush.bf16.msra.mxu0 0
      %394 = vmatpush.bf16.msra.mxu0 0
      %395 = vmatpush.bf16.msra.mxu0 0
      %396 = vmatpush.bf16.msra.mxu0 0
      %397 = vmatpush.bf16.msra.mxu0 %v359
      %398 = vmatmul.bf16.gmra.mxu0 %v388
      %v399 = vpop.f32.mrf.mxu0
      %v400 = vadd.f32 %v377, %v399
      %v401 = vpop.f32.mrf.mxu0
      %v402 = vadd.f32 %v379, %v401
      %403 = vdwg.mxu0
      %v404 = vld [vmem:[%s323] sm:$0xf]
      %v405 = vld [vmem:[%s323 + $0x4] sm:$0xf]
      %v408 = vunpack.c.l.b16 %v404
      %v409 = vunpack.c.l.b16 %v405
      %v410 = vpack.c.b16 %v409, %v408
      %411 = vrot.lane.b32.xlu0 %v359, 111
      %v412 = vpop.permute.xlu0 %411
      %v415 = vsel %vm363, %v410, 0
      %417 = vmatpush.bf16.msra.mxu0 0
      %418 = vmatpush.bf16.msra.mxu0 0
      %419 = vmatpush.bf16.msra.mxu0 0
      %420 = vmatpush.bf16.msra.mxu0 0
      %421 = vmatpush.bf16.msra.mxu0 0
      %422 = vmatpush.bf16.msra.mxu0 0
      %423 = vmatpush.bf16.msra.mxu0 0
      %424 = vmatpush.bf16.msra.mxu0 %v412
      %425 = vmatmul.bf16.gmra.mxu0 %v415
      %v426 = vpop.f32.mrf.mxu0
      %v427 = vadd.f32 0.0, %v426
      %v428 = vpop.f32.mrf.mxu0
      %v429 = vadd.f32 0.0, %v428
      %430 = vdwg.mxu0
      %v431 = vadd.f32 %v400, %v427
      %v432 = vadd.f32 %v402, %v429
      %v433 = vld [vmem:[%s329] sm:$0xf]
      %v434 = vld [vmem:[%s329 + $0x4] sm:$0xf]
      %v437 = vunpack.c.l.b16 %v433
      %v438 = vunpack.c.l.b16 %v434
      %v439 = vpack.c.b16 %v438, %v437
      %440 = vrot.lane.b32.xlu0 %v359, 110
      %v441 = vpop.permute.xlu0 %440
      %v444 = vsel %vm363, %v439, 0
      %446 = vmatpush.bf16.msra.mxu0 0
      %447 = vmatpush.bf16.msra.mxu0 0
      %448 = vmatpush.bf16.msra.mxu0 0
      %449 = vmatpush.bf16.msra.mxu0 0
      %450 = vmatpush.bf16.msra.mxu0 0
      %451 = vmatpush.bf16.msra.mxu0 0
      %452 = vmatpush.bf16.msra.mxu0 0
      %453 = vmatpush.bf16.msra.mxu0 %v441
      %454 = vmatmul.bf16.gmra.mxu0 %v444
      %v455 = vpop.f32.mrf.mxu0
      %v456 = vadd.f32 0.0, %v455
      %v457 = vpop.f32.mrf.mxu0
      %v458 = vadd.f32 0.0, %v457
      %459 = vdwg.mxu0
      %v460 = vadd.f32 %v431, %v456
      %v461 = vadd.f32 %v432, %v458
      %v462 = vld [vmem:[%s335] sm:$0xff]
      %v463 = vld [vmem:[%s335 + $0x8] sm:$0xff]
      %465 = vset.pattern.permute.xlu0 0
      %466 = vperm.xlu0 %465, %v462
      %v467 = vpop.permute.xlu0 %466
      %470 = vset.pattern.permute.xlu0 0
      %471 = vperm.xlu0 %470, %v463
      %v472 = vpop.permute.xlu0 %471
      %v474 = vadd.f32 %v460, %v467
      %v475 = vadd.f32 %v461, %v472
      %vm476 = vcmp.ge.f32.partialorder %v474, 0.0
      %vm477 = vcmp.ge.f32.partialorder %v475, 0.0
      %v478 = vmul.f32 %v474, 0.01
      %v479 = vmul.f32 %v475, 0.01
      %v480 = vsel %vm476, %v474, %v478
      %v481 = vsel %vm477, %v475, %v479
      %v482 = vpack.c.bf16 %v480, %v480
      %v483 = vpack.c.bf16 %v481, %v481
      %vm484 = vcmask 551936
      %485 = vst.msk [vmem:[%s341] sm:$0xf] %vm484, %v482
      %486 = vst.msk [vmem:[%s341 + $0x4] sm:$0xf] %vm484, %v483
      %s487 = smul.u32 2, %s17
      %p488 = scmp.lt.s32.totalorder %s487, 3
      %s489 = scalar_select %p488, %s487, 3
      %s490 = smul.addr %s489, 4
      %s491 = scalar_lea.vmem %s6, %s490
      // Predicated region
      $region45: #{unet_up_block_forward.2} parent=43 // pred_check
        %p492 = pneg %p186
      $region46: #{unet_up_block_forward.2} parent=43 // pred_check_branch
        %494 = sbr.rel (%p492) target = $region48
      $region47: #{unet_up_block_forward.2} parent=43 // pred_region
        %s495 = smul.u32 2, %s17
      $region48: #{unet_up_block_forward.2} parent=43 // pred_fallthru
        _
    $region44: #{unet_up_block_forward.2} parent=5 // pred_fallthru
      _
    %p496 = scmp.le.s32.totalorder 2, %s12
    // Predicated region
    $region49: #{unet_up_block_forward.2} parent=5 // pred_check
      %p497 = pneg %p496
    $region50: #{unet_up_block_forward.2} parent=5 // pred_check_branch
      %499 = sbr.rel (%p497) target = $region52
    $region51: #{unet_up_block_forward.2} parent=5 // pred_region
      %s500 = ssub.s32 %s12, 2
      // Predicated region
      $region53: #{unet_up_block_forward.2} parent=51 // pred_check
        %p501 = pneg %p192
      $region54: #{unet_up_block_forward.2} parent=51 // pred_check_branch
        %503 = sbr.rel (%p501) target = $region56
      $region55: #{unet_up_block_forward.2} parent=51 // pred_region
        %s504 = smul.u32 2, %s18
        %p505 = scmp.lt.s32.totalorder %s504, 3
        %s506 = scalar_select %p505, %s504, 3
        %s507 = smul.addr %s506, 4
        %s508 = scalar_lea.vmem %s6, %s507
      $region56: #{unet_up_block_forward.2} parent=51 // pred_fallthru
        _
    $region52: #{unet_up_block_forward.2} parent=5 // pred_fallthru
      _
  $region6: #{unet_up_block_forward.2} parent=0 // loop_footer
    %s16 = sadd.s32 1, %s12
  $region7: #{unet_up_block_forward.2} parent=0 // loop_footer_branch
    %11 = sbr.rel target = $region3
  $region8: #{unet_up_block_forward.2} parent=0 // loop_exit
    _

</llo_original>
